<compile_context>
chip_gen: v5e
topology: v5e:2x2
jax: 0.10.0
libtpu: 0.0.40
codegen_flags: <defaults>
</compile_context>

<pallas_src>
import functools

import jax
import jax.numpy as jnp
from jax.experimental import pallas as pl
from jax.experimental.pallas import tpu as pltpu

_LANE = 128


def _bloom_gelu_kernel(x_ref, o_ref, *, compute_dtype):
    x = x_ref[...].astype(compute_dtype)
    # Exact BloomGELU tanh form (matches the PyTorch module).  The equivalent
    # x * sigmoid(1.59576912*x*(1+0.044715*x*x)) saves one VALU add+mul, but
    # VALU is not the bottleneck for this HBM-bound op, so keep the reference
    # formulation.
    inner = 0.79788456 * x * (1.0 + 0.044715 * (x * x))
    y = x * 0.5 * (1.0 + jnp.tanh(inner))
    o_ref[...] = y.astype(o_ref.dtype)


def _round_up(a: int, b: int) -> int:
    return ((a + b - 1) // b) * b


def _ceil_div(a: int, b: int) -> int:
    return -(-a // b)


def _vmem_capacity_bytes() -> int:
    try:
        return int(pltpu.get_tpu_info().vmem_capacity_bytes)
    except Exception:
        return 64 * 1024 * 1024  # conservative (v7x-sized) fallback


def _is_v7x() -> bool:
    try:
        kind = jax.devices()[0].device_kind.lower()
    except Exception:
        return False
    return ("v7" in kind) or ("tpu7" in kind)


def _choose_width_no_pad(n: int):
    """Largest lane-dense width that exactly divides n (no padding needed)."""
    for w in (2048, 1024, 512, 256, 128):
        if n % w == 0:
            return w
    return None


def _choose_tile_rows(rows: int, bytes_per_row: int, sublane: int, vmem_cap: int) -> int:
    # ~4 MiB blocks, ~1 MiB floor, and >= 8 grid steps when the floor allows it
    # (keeps the double-buffered DMA pipeline full; >= 4 blocks per v7x core).
    target_block_bytes = min(4 << 20, max(vmem_cap // 16, 512 << 10))
    floor_block_bytes = 1 << 20

    max_tile_rows = max(sublane, (target_block_bytes // bytes_per_row) // sublane * sublane)
    floor_tile_rows = min(
        max_tile_rows,
        _round_up(max(1, _ceil_div(floor_block_bytes, bytes_per_row)), sublane),
    )

    want_steps = 8
    tile_rows = _round_up(max(1, _ceil_div(rows, want_steps)), sublane)
    tile_rows = max(floor_tile_rows, min(tile_rows, max_tile_rows))
    # Never request more rows than the (sublane-rounded) array actually has.
    tile_rows = min(tile_rows, _round_up(rows, sublane))
    return tile_rows


def bloom_gelu(x: jax.Array, *, donate: bool = False) -> jax.Array:
    """Elementwise Bloom GELU: x * 0.5 * (1 + tanh(0.79788456*x*(1 + 0.044715*x*x)))."""
    orig_shape = x.shape
    dtype = x.dtype
    itemsize = jnp.dtype(dtype).itemsize
    n = int(x.size)
    if n == 0:
        return x

    # Sublane packing: 8 rows for 32-bit, 16 for 16-bit, 32 for 8-bit dtypes.
    sublane = 8 * max(1, 4 // itemsize)
    vmem_cap = _vmem_capacity_bytes()

    # bf16 compute only on v7x (bf16 VPU/EUP, higher HBM BW); f32 elsewhere
    # (mandatory on v5e, neutral on v6e since the op stays HBM-bound).
    compute_dtype = jnp.float32
    if dtype == jnp.bfloat16 and _is_v7x():
        compute_dtype = jnp.bfloat16

    W = _choose_width_no_pad(n)
    needs_pad = W is None
    if needs_pad:
        # Fallback: zero-pad into a lane-dense slab (gelu(0) == 0 is exact).
        W = 2048
        while W > _LANE and n < W * sublane:
            W //= 2
        rows = _ceil_div(n, W)
        n_total = rows * W
        x_flat = jnp.pad(x.reshape(-1), (0, n_total - n))
        x2d = x_flat.reshape(rows, W)
    else:
        rows = n // W
        n_total = n
        x2d = x.reshape(rows, W)  # metadata-only reshape: no extra HBM traffic

    tile_rows = _choose_tile_rows(rows, W * itemsize, sublane, vmem_cap)
    grid_n = max(1, pl.cdiv(rows, tile_rows))
    block_bytes = tile_rows * W * itemsize
    # in + out, double-buffered, plus a few MiB of headroom.
    vmem_limit = int(min(vmem_cap, max(4 * block_bytes + (4 << 20), 16 << 20)))

    kernel = functools.partial(_bloom_gelu_kernel, compute_dtype=compute_dtype)
    # Alias input->output only on the exact-shape fast path with donated input.
    alias = {0: 0} if (donate and not needs_pad) else {}

    out2d = pl.pallas_call(
        kernel,
        out_shape=jax.ShapeDtypeStruct((rows, W), dtype),
        grid_spec=pltpu.PrefetchScalarGridSpec(
            num_scalar_prefetch=0,
            grid=(grid_n,),
            in_specs=[pl.BlockSpec((tile_rows, W), lambda i: (i, 0))],
            out_specs=pl.BlockSpec((tile_rows, W), lambda i: (i, 0)),
        ),
        compiler_params=pltpu.CompilerParams(
            dimension_semantics=("parallel",),
            vmem_limit_bytes=vmem_limit,
        ),
        cost_estimate=pl.CostEstimate(
            flops=6 * n_total,
            transcendentals=n_total,
            bytes_accessed=2 * n_total * itemsize,
        ),
        input_output_aliases=alias,
    )(x2d)

    if needs_pad:
        return out2d.reshape(-1)[:n].reshape(orig_shape)
    return out2d.reshape(orig_shape)


def bloom_gelu_ref(x):
    xf = x.astype(jnp.float32)
    y = xf * 0.5 * (1.0 + jnp.tanh(0.79788456 * xf * (1.0 + 0.044715 * xf * xf)))
    return y.astype(x.dtype)


if __name__ == "__main__":
    key = jax.random.PRNGKey(0)
    k1, k2, k3 = jax.random.split(key, 3)

    # Transformer-activation-like shape (no-pad fast path): (batch=2, seq=8, 4*hidden=128).
    x = jax.random.normal(k1, (2, 8, 128), dtype=jnp.float32)
    out = jax.block_until_ready(bloom_gelu(x))
    ref = bloom_gelu_ref(x)
    assert out.shape == x.shape and out.dtype == x.dtype
    assert jnp.allclose(out, ref, atol=1e-4, rtol=1e-4)

    # Odd-sized bf16 input: exercises the padding fallback + 16-row sublane packing.
    xb = jax.random.normal(k2, (3, 5, 200), dtype=jnp.bfloat16)
    outb = jax.block_until_ready(bloom_gelu(xb))
    refb = bloom_gelu_ref(xb)
    assert outb.shape == xb.shape and outb.dtype == xb.dtype
    assert jnp.allclose(
        outb.astype(jnp.float32), refb.astype(jnp.float32), atol=1e-2, rtol=1e-2
    )

    # Larger (still small) f32 case on the no-pad path, W=2048 slab.
    xc = jax.random.normal(k3, (4, 16, 256), dtype=jnp.float32)
    outc = jax.block_until_ready(bloom_gelu(xc))
    refc = bloom_gelu_ref(xc)
    assert outc.shape == xc.shape and outc.dtype == xc.dtype
    assert jnp.allclose(outc, refc, atol=1e-4, rtol=1e-4)

    print("KERNEL_OK")
</pallas_src>

<mosaic_0001>
module attributes {stable_mosaic.version = 11 : i64} {
  func.func @_bloom_gelu_kernel(%arg0: i32, %arg1: memref<8x2048xf32, #tpu.memory_space<vmem>>, %arg2: memref<8x2048xf32, #tpu.memory_space<vmem>>) attributes {dimension_semantics = [#tpu.dimension_semantics<parallel>], iteration_bounds = array<i64: 1>, scalar_prefetch = 0 : i64, scratch_operands = 0 : i64, tpu.core_type = #tpu.core_type<tc>, window_params = [{transform_indices = @transform_0, window_bounds = array<i64: 8, 2048>}, {transform_indices = @transform_1, window_bounds = array<i64: 8, 2048>}]} {
    %c0 = arith.constant 0 : index
    %c0_0 = arith.constant 0 : index
    %0 = vector.load %arg1[%c0, %c0_0] : memref<8x2048xf32, #tpu.memory_space<vmem>>, vector<8x2048xf32>
    %cst = arith.constant 0.797884583 : f32
    %1 = vector.broadcast %cst : f32 to vector<8x2048xf32>
    %2 = arith.mulf %1, %0 : vector<8x2048xf32>
    %3 = arith.mulf %0, %0 : vector<8x2048xf32>
    %cst_1 = arith.constant 4.471500e-02 : f32
    %4 = vector.broadcast %cst_1 : f32 to vector<8x2048xf32>
    %5 = arith.mulf %4, %3 : vector<8x2048xf32>
    %cst_2 = arith.constant 1.000000e+00 : f32
    %6 = vector.broadcast %cst_2 : f32 to vector<8x2048xf32>
    %7 = arith.addf %6, %5 : vector<8x2048xf32>
    %8 = arith.mulf %2, %7 : vector<8x2048xf32>
    %cst_3 = arith.constant 5.000000e-01 : f32
    %9 = vector.broadcast %cst_3 : f32 to vector<8x2048xf32>
    %10 = arith.mulf %0, %9 : vector<8x2048xf32>
    %11 = math.tanh %8 : vector<8x2048xf32>
    %cst_4 = arith.constant 1.000000e+00 : f32
    %12 = vector.broadcast %cst_4 : f32 to vector<8x2048xf32>
    %13 = arith.addf %12, %11 : vector<8x2048xf32>
    %14 = arith.mulf %10, %13 : vector<8x2048xf32>
    %c0_5 = arith.constant 0 : index
    %c0_6 = arith.constant 0 : index
    %15 = vector.load %arg2[%c0_5, %c0_6] : memref<8x2048xf32, #tpu.memory_space<vmem>>, vector<8x2048xf32>
    tpu.vector_store %arg2[%c0_5, %c0_6], %14 {strides = array<i32>} : memref<8x2048xf32, #tpu.memory_space<vmem>>, vector<8x2048xf32>,
    return
  }
  func.func @transform_0(%arg0: i32) -> (i32, i32) {
    %c0_i32 = arith.constant 0 : i32
    %c0_i32_0 = arith.constant 0 : i32
    return %arg0, %c0_i32 : i32, i32
  }
  func.func @transform_1(%arg0: i32) -> (i32, i32) {
    %c0_i32 = arith.constant 0 : i32
    %c0_i32_0 = arith.constant 0 : i32
    return %arg0, %c0_i32 : i32, i32
  }
}

</mosaic_0001>

<llo_original>
// kernel: tpu_custom_call.1
$region0: #{tpu_custom_call.1}
  #allocation0 [shape = 'u32[]', space=smem, size = 0x4, offset = 0x4, fixed_abs, tag = 'smem constant byte address 0x4 - core index']
  #allocation1 [shape = 'u32[72,128]{1,0:T(1,128)}', space=vmem, size = 0x9000, scoped, tag = 'internal scratch']
  %s0 = inlined_call_operand.hbm [shape: f32[1,2048], index: 0, kind: input, shape index: {}]
  %s1 = inlined_call_operand.hbm [shape: f32[1,2048], index: 1, kind: output, shape index: {}]
  %s2 = sld [smem:[#allocation0]]
  $region18: #{tpu_custom_call.1} parent=0
    _
  %s4 = ssub.s32 1, %s2
  %s5 = scalar_select 0, %s4, %s2
  $region1: #{tpu_custom_call.1} parent=0
    #allocation2 [shape = 'u8[65536]{0}', space=vmem, size = 0x10000, scoped, tag = 'input window, operand 0, single buffered']
    #allocation3 [shape = 's32[1]{0}', space=sflag, size = 0x4, scoped, tag = 'scoped memory for tpu_custom_call.1']
    #allocation4 [shape = 's32[1]{0}', space=sflag, size = 0x4, scoped, tag = 'scoped memory for tpu_custom_call.1']
    #allocation5 [shape = 'u8[65536]{0}', space=vmem, size = 0x10000, scoped, tag = 'output window, operand 0, single buffered']
    %6 = vsyncpa [#allocation3], 0
    %7 = vsyncpa [#allocation4], 0
    // Predicated region
    $region2: #{tpu_custom_call.1} parent=1 // pred_check
      _
    $region3: #{tpu_custom_call.1} parent=1 // pred_check_branch
      %9 = sbr.rel (0) target = $region5
    $region4: #{tpu_custom_call.1} parent=1 // pred_region
      %11 = vsyncadd [#allocation3], 1792
      %s12 = sshll.u32 %s0, 4
      %s13 = int_to_ptr.hbm [resolvable:$true] %s12
      %s14 = sshll.u32 [#allocation2], 4
      %s15 = int_to_ptr.vmem [resolvable:$true] %s14
      %20 = dma.hbm_to_vmem [thread:$0]  %s13, 256, %s15, [#allocation3], 256, 256, 16
    $region5: #{tpu_custom_call.1} parent=1 // pred_fallthru
      _
    // Predicated region
    $region6: #{tpu_custom_call.1} parent=1 // pred_check
      _
    $region7: #{tpu_custom_call.1} parent=1 // pred_check_branch
      %22 = sbr.rel (0) target = $region9
    $region8: #{tpu_custom_call.1} parent=1 // pred_region
      %24 = dma.done [#allocation3], 2048
    $region9: #{tpu_custom_call.1} parent=1 // pred_fallthru
      _
    %v25 = vld [vmem:[#allocation2] sm:$0xff]
    %v26 = vld [vmem:[#allocation2 + $0x8] sm:$0xff]
    %v27 = vld [vmem:[#allocation2 + $0x10] sm:$0xff]
    %v28 = vld [vmem:[#allocation2 + $0x18] sm:$0xff]
    %v29 = vld [vmem:[#allocation2 + $0x20] sm:$0xff]
    %v30 = vld [vmem:[#allocation2 + $0x28] sm:$0xff]
    %v31 = vld [vmem:[#allocation2 + $0x30] sm:$0xff]
    %v32 = vld [vmem:[#allocation2 + $0x38] sm:$0xff]
    %v33 = vld [vmem:[#allocation2 + $0x40] sm:$0xff]
    %v34 = vld [vmem:[#allocation2 + $0x48] sm:$0xff]
    %v35 = vld [vmem:[#allocation2 + $0x50] sm:$0xff]
    %v36 = vld [vmem:[#allocation2 + $0x58] sm:$0xff]
    %v37 = vld [vmem:[#allocation2 + $0x60] sm:$0xff]
    %v38 = vld [vmem:[#allocation2 + $0x68] sm:$0xff]
    %v39 = vld [vmem:[#allocation2 + $0x70] sm:$0xff]
    %v40 = vld [vmem:[#allocation2 + $0x78] sm:$0xff]
    %v41 = vmul.f32 %v25, 0.7978846
    %v42 = vmul.f32 %v26, 0.7978846
    %v43 = vmul.f32 %v27, 0.7978846
    %v44 = vmul.f32 %v28, 0.7978846
    %v45 = vmul.f32 %v29, 0.7978846
    %v46 = vmul.f32 %v30, 0.7978846
    %v47 = vmul.f32 %v31, 0.7978846
    %v48 = vmul.f32 %v32, 0.7978846
    %v49 = vmul.f32 %v33, 0.7978846
    %v50 = vmul.f32 %v34, 0.7978846
    %v51 = vmul.f32 %v35, 0.7978846
    %v52 = vmul.f32 %v36, 0.7978846
    %v53 = vmul.f32 %v37, 0.7978846
    %v54 = vmul.f32 %v38, 0.7978846
    %v55 = vmul.f32 %v39, 0.7978846
    %v56 = vmul.f32 %v40, 0.7978846
    %v57 = vmul.f32 %v25, %v25
    %v58 = vmul.f32 %v26, %v26
    %v59 = vmul.f32 %v27, %v27
    %v60 = vmul.f32 %v28, %v28
    %v61 = vmul.f32 %v29, %v29
    %v62 = vmul.f32 %v30, %v30
    %v63 = vmul.f32 %v31, %v31
    %v64 = vmul.f32 %v32, %v32
    %v65 = vmul.f32 %v33, %v33
    %v66 = vmul.f32 %v34, %v34
    %v67 = vmul.f32 %v35, %v35
    %v68 = vmul.f32 %v36, %v36
    %v69 = vmul.f32 %v37, %v37
    %v70 = vmul.f32 %v38, %v38
    %v71 = vmul.f32 %v39, %v39
    %v72 = vmul.f32 %v40, %v40
    %v73 = vmul.f32 %v57, 0.044715
    %v74 = vmul.f32 %v58, 0.044715
    %v75 = vmul.f32 %v59, 0.044715
    %v76 = vmul.f32 %v60, 0.044715
    %v77 = vmul.f32 %v61, 0.044715
    %v78 = vmul.f32 %v62, 0.044715
    %v79 = vmul.f32 %v63, 0.044715
    %v80 = vmul.f32 %v64, 0.044715
    %v81 = vmul.f32 %v65, 0.044715
    %v82 = vmul.f32 %v66, 0.044715
    %v83 = vmul.f32 %v67, 0.044715
    %v84 = vmul.f32 %v68, 0.044715
    %v85 = vmul.f32 %v69, 0.044715
    %v86 = vmul.f32 %v70, 0.044715
    %v87 = vmul.f32 %v71, 0.044715
    %v88 = vmul.f32 %v72, 0.044715
    %v89 = vadd.f32 %v73, 1.0
    %v90 = vadd.f32 %v74, 1.0
    %v91 = vadd.f32 %v75, 1.0
    %v92 = vadd.f32 %v76, 1.0
    %v93 = vadd.f32 %v77, 1.0
    %v94 = vadd.f32 %v78, 1.0
    %v95 = vadd.f32 %v79, 1.0
    %v96 = vadd.f32 %v80, 1.0
    %v97 = vadd.f32 %v81, 1.0
    %v98 = vadd.f32 %v82, 1.0
    %v99 = vadd.f32 %v83, 1.0
    %v100 = vadd.f32 %v84, 1.0
    %v101 = vadd.f32 %v85, 1.0
    %v102 = vadd.f32 %v86, 1.0
    %v103 = vadd.f32 %v87, 1.0
    %v104 = vadd.f32 %v88, 1.0
    %v105 = vmul.f32 %v41, %v89
    %v106 = vmul.f32 %v42, %v90
    %v107 = vmul.f32 %v43, %v91
    %v108 = vmul.f32 %v44, %v92
    %v109 = vmul.f32 %v45, %v93
    %v110 = vmul.f32 %v46, %v94
    %v111 = vmul.f32 %v47, %v95
    %v112 = vmul.f32 %v48, %v96
    %v113 = vmul.f32 %v49, %v97
    %v114 = vmul.f32 %v50, %v98
    %v115 = vmul.f32 %v51, %v99
    %v116 = vmul.f32 %v52, %v100
    %v117 = vmul.f32 %v53, %v101
    %v118 = vmul.f32 %v54, %v102
    %v119 = vmul.f32 %v55, %v103
    %v120 = vmul.f32 %v56, %v104
    %v121 = vmul.f32 %v25, 0.5
    %v122 = vmul.f32 %v26, 0.5
    %v123 = vmul.f32 %v27, 0.5
    %v124 = vmul.f32 %v28, 0.5
    %v125 = vmul.f32 %v29, 0.5
    %v126 = vmul.f32 %v30, 0.5
    %v127 = vmul.f32 %v31, 0.5
    %v128 = vmul.f32 %v32, 0.5
    %v129 = vmul.f32 %v33, 0.5
    %v130 = vmul.f32 %v34, 0.5
    %v131 = vmul.f32 %v35, 0.5
    %v132 = vmul.f32 %v36, 0.5
    %v133 = vmul.f32 %v37, 0.5
    %v134 = vmul.f32 %v38, 0.5
    %v135 = vmul.f32 %v39, 0.5
    %v136 = vmul.f32 %v40, 0.5
    %v137 = vtanh.pop %v105
    %v138 = vtanh.pop %v106
    %v139 = vtanh.pop %v107
    %v140 = vtanh.pop %v108
    %v141 = vtanh.pop %v109
    %v142 = vtanh.pop %v110
    %v143 = vtanh.pop %v111
    %v144 = vtanh.pop %v112
    %v145 = vtanh.pop %v113
    %v146 = vtanh.pop %v114
    %v147 = vtanh.pop %v115
    %v148 = vtanh.pop %v116
    %v149 = vtanh.pop %v117
    %v150 = vtanh.pop %v118
    %v151 = vtanh.pop %v119
    %v152 = vtanh.pop %v120
    %v153 = vadd.f32 %v137, 1.0
    %v154 = vadd.f32 %v138, 1.0
    %v155 = vadd.f32 %v139, 1.0
    %v156 = vadd.f32 %v140, 1.0
    %v157 = vadd.f32 %v141, 1.0
    %v158 = vadd.f32 %v142, 1.0
    %v159 = vadd.f32 %v143, 1.0
    %v160 = vadd.f32 %v144, 1.0
    %v161 = vadd.f32 %v145, 1.0
    %v162 = vadd.f32 %v146, 1.0
    %v163 = vadd.f32 %v147, 1.0
    %v164 = vadd.f32 %v148, 1.0
    %v165 = vadd.f32 %v149, 1.0
    %v166 = vadd.f32 %v150, 1.0
    %v167 = vadd.f32 %v151, 1.0
    %v168 = vadd.f32 %v152, 1.0
    %v169 = vmul.f32 %v121, %v153
    %v170 = vmul.f32 %v122, %v154
    %v171 = vmul.f32 %v123, %v155
    %v172 = vmul.f32 %v124, %v156
    %v173 = vmul.f32 %v125, %v157
    %v174 = vmul.f32 %v126, %v158
    %v175 = vmul.f32 %v127, %v159
    %v176 = vmul.f32 %v128, %v160
    %v177 = vmul.f32 %v129, %v161
    %v178 = vmul.f32 %v130, %v162
    %v179 = vmul.f32 %v131, %v163
    %v180 = vmul.f32 %v132, %v164
    %v181 = vmul.f32 %v133, %v165
    %v182 = vmul.f32 %v134, %v166
    %v183 = vmul.f32 %v135, %v167
    %v184 = vmul.f32 %v136, %v168
    %185 = vst [vmem:[#allocation5] sm:$0xff] %v169
    %186 = vst [vmem:[#allocation5 + $0x8] sm:$0xff] %v170
    %187 = vst [vmem:[#allocation5 + $0x10] sm:$0xff] %v171
    %188 = vst [vmem:[#allocation5 + $0x18] sm:$0xff] %v172
    %189 = vst [vmem:[#allocation5 + $0x20] sm:$0xff] %v173
    %190 = vst [vmem:[#allocation5 + $0x28] sm:$0xff] %v174
    %191 = vst [vmem:[#allocation5 + $0x30] sm:$0xff] %v175
    %192 = vst [vmem:[#allocation5 + $0x38] sm:$0xff] %v176
    %193 = vst [vmem:[#allocation5 + $0x40] sm:$0xff] %v177
    %194 = vst [vmem:[#allocation5 + $0x48] sm:$0xff] %v178
    %195 = vst [vmem:[#allocation5 + $0x50] sm:$0xff] %v179
    %196 = vst [vmem:[#allocation5 + $0x58] sm:$0xff] %v180
    %197 = vst [vmem:[#allocation5 + $0x60] sm:$0xff] %v181
    %198 = vst [vmem:[#allocation5 + $0x68] sm:$0xff] %v182
    %199 = vst [vmem:[#allocation5 + $0x70] sm:$0xff] %v183
    %200 = vst [vmem:[#allocation5 + $0x78] sm:$0xff] %v184
    // Predicated region
    $region10: #{tpu_custom_call.1} parent=1 // pred_check
      _
    $region11: #{tpu_custom_call.1} parent=1 // pred_check_branch
      %202 = sbr.rel (0) target = $region13
    $region12: #{tpu_custom_call.1} parent=1 // pred_region
      %204 = vsyncadd [#allocation4], 1792
      %s205 = sshll.u32 [#allocation5], 4
      %s206 = int_to_ptr.vmem [resolvable:$true] %s205
      %s207 = sshll.u32 %s1, 4
      %s208 = int_to_ptr.hbm [resolvable:$true] %s207
      %213 = dma.vmem_to_hbm [thread:$0]  %s206, 256, %s208, [#allocation4], 256, 256, 16
    $region13: #{tpu_custom_call.1} parent=1 // pred_fallthru
      _
    // Predicated region
    $region14: #{tpu_custom_call.1} parent=1 // pred_check
      _
    $region15: #{tpu_custom_call.1} parent=1 // pred_check_branch
      %215 = sbr.rel (0) target = $region17
    $region16: #{tpu_custom_call.1} parent=1 // pred_region
      %217 = dma.done [#allocation4], 2048
    $region17: #{tpu_custom_call.1} parent=1 // pred_fallthru
      _
    %218 = vsyncpa [#allocation3], 1
    %219 = vsyncpa [#allocation4], 1

</llo_original>
